<compile_context>
chip_gen: v6e
topology: v6e:2x2x1
jax: 0.10.0
libtpu: 0.0.40
codegen_flags: <defaults>
</compile_context>

<pallas_src>
import functools

import jax
import jax.numpy as jnp
from jax import lax
from jax.experimental import pallas as pl
from jax.experimental.pallas import tpu as pltpu


# --------------------------------------------------------------------------- #
# Chip-aware helpers
# --------------------------------------------------------------------------- #
def _vmem_capacity_bytes():
    try:
        return int(pltpu.get_tpu_info().vmem_capacity_bytes)
    except Exception:
        return 64 * 2**20            # conservative: v7x per-TensorCore VMEM


def _mxu_row_target():
    try:
        kind = jax.devices()[0].device_kind.lower()
    except Exception:
        return 256
    if "v5 lite" in kind or "v5e" in kind or "v5lite" in kind:
        return 128                   # v5e MXU is 4x128x128: M=128 fills it
    return 256                       # v6e / v7x: 256-wide MXU


def _pick_batch_block(B, S, mxu_rows):
    """Smallest divisor of B whose flattened row count bb*S still meets the MXU
    fill target; never split the grid below the fill target just to make more
    grid steps."""
    need = max(1, -(-mxu_rows // S))             # ceil(mxu_rows / S)
    if need >= B:
        return B
    for bb in range(need, B):
        if B % bb == 0:
            return bb
    return B


def _pick_seq_tile(S, target):
    """Largest divisor of S that is <= target and sublane-friendly (multiple of
    8), falling back to the full extent (always a legal block)."""
    for cand in range(min(target, S), 0, -1):
        if S % cand == 0 and (cand % 8 == 0 or cand == S):
            return cand
    return S


# --------------------------------------------------------------------------- #
# Kernels
# --------------------------------------------------------------------------- #
def _attn_concat_kernel(theta_ref, w_ref, b_ref, out_ref, *, mm_dtype):
    """Monolithic (small-S) variant: whole (S, S) softmax in VMEM.

    theta_ref: (bb, S, D)   input dtype (cast to mm_dtype in-kernel)
    w_ref:     (D, D)       f32, pre-scaled by D**-0.25
    b_ref:     (1, D)       f32, pre-scaled by D**-0.25
    out_ref:   (bb, S, 2*D) = concat([attn @ theta, theta], axis=-1)
    """
    bb, S, D = theta_ref.shape

    theta = theta_ref[...]
    theta_mm = theta.astype(mm_dtype)
    w = w_ref[...].astype(mm_dtype)
    bias = b_ref[...]                                      # (1, D) f32

    # --- query projection: flatten batch*seq so the MXU M-dim is large ------
    theta2d = theta_mm.reshape(bb * S, D)
    q = lax.dot_general(theta2d, w, (((1,), (1,)), ((), ())),
                        preferred_element_type=jnp.float32) + bias
    q = q.reshape(bb, S, D)
    q_mm = q.astype(mm_dtype)

    # --- attention scores Q @ Q^T (1/sqrt(D) already folded into W/b) -------
    scores = jnp.einsum("bse,bte->bst", q_mm, q_mm,
                        preferred_element_type=jnp.float32)        # (bb, S, S)

    # --- softmax in f32; normalization deferred past the AV matmul ----------
    m = jnp.max(scores, axis=-1, keepdims=True)
    e = jnp.exp(scores - m)
    denom = jnp.sum(e, axis=-1, keepdims=True)                     # (bb, S, 1)

    av = jnp.einsum("bst,btd->bsd", e.astype(mm_dtype), theta_mm,
                    preferred_element_type=jnp.float32)            # (bb, S, D)
    attn_out = av * pl.reciprocal(denom, approx=True)              # EUP slot

    # theta is already resident in VMEM -> write both halves from here.
    out_ref[...] = jnp.concatenate(
        [attn_out.astype(out_ref.dtype), theta.astype(out_ref.dtype)], axis=-1)


def _attn_concat_flash_kernel(theta_q_ref, theta_k_ref, w_ref, b_ref, out_ref,
                              q_sc, m_sc, l_sc, acc_sc, *, mm_dtype):
    """Key-tiled online-softmax variant: working set O(tq*D + tk*D + tq*tk)."""
    ki = pl.program_id(2)
    nk = pl.num_programs(2)
    bb, tq, D = theta_q_ref.shape
    tk = theta_k_ref.shape[1]

    w = w_ref[...].astype(mm_dtype)
    bias = b_ref[...]                                              # (1, D) f32

    @pl.when(ki == 0)
    def _init():
        tq2d = theta_q_ref[...].astype(mm_dtype).reshape(bb * tq, D)
        q = lax.dot_general(tq2d, w, (((1,), (1,)), ((), ())),
                            preferred_element_type=jnp.float32) + bias
        q_sc[...] = q.reshape(bb, tq, D).astype(mm_dtype)
        m_sc[...] = jnp.full(m_sc.shape, -jnp.inf, m_sc.dtype)
        l_sc[...] = jnp.zeros(l_sc.shape, l_sc.dtype)
        acc_sc[...] = jnp.zeros(acc_sc.shape, acc_sc.dtype)

    theta_k_mm = theta_k_ref[...].astype(mm_dtype)
    tk2d = theta_k_mm.reshape(bb * tk, D)
    k = lax.dot_general(tk2d, w, (((1,), (1,)), ((), ())),
                        preferred_element_type=jnp.float32) + bias
    k_mm = k.reshape(bb, tk, D).astype(mm_dtype)

    s = jnp.einsum("bqe,bke->bqk", q_sc[...], k_mm,
                   preferred_element_type=jnp.float32)             # (bb,tq,tk)

    m_prev = m_sc[...]
    m_new = jnp.maximum(m_prev, jnp.max(s, axis=-1, keepdims=True))
    alpha = jnp.exp(m_prev - m_new)
    p = jnp.exp(s - m_new)
    l_sc[...] = alpha * l_sc[...] + jnp.sum(p, axis=-1, keepdims=True)
    acc_sc[...] = alpha * acc_sc[...] + jnp.einsum(
        "bqk,bkd->bqd", p.astype(mm_dtype), theta_k_mm,
        preferred_element_type=jnp.float32)
    m_sc[...] = m_new

    @pl.when(ki == nk - 1)
    def _finalize():
        attn_out = acc_sc[...] * pl.reciprocal(l_sc[...], approx=True)
        out_ref[...] = jnp.concatenate(
            [attn_out.astype(out_ref.dtype),
             theta_q_ref[...].astype(out_ref.dtype)], axis=-1)


# --------------------------------------------------------------------------- #
# Wrapper
# --------------------------------------------------------------------------- #
def self_attention_forward(theta, w, b, *, use_bf16_matmul=True,
                           batch_block=None, force_flash=False,
                           q_tile=None, k_tile=None):
    """theta: (B, S, D), w: (D, D), b: (D,) -> (B, S, 2*D)."""
    B, S, D = theta.shape
    out_dtype = theta.dtype
    mm_dtype = jnp.bfloat16 if use_bf16_matmul else jnp.float32

    # Fold the 1/sqrt(d_k) score scale into the (tiny) projection params once:
    # (c*q)(c*q)^T == q q^T / sqrt(D) with c = D ** -0.25.
    c = float(D) ** -0.25
    w_s = w.astype(jnp.float32) * c
    b_s = (b.astype(jnp.float32) * c).reshape(1, D)

    vmem_cap = _vmem_capacity_bytes()
    vmem_budget = int(vmem_cap * 0.8)        # ~51 MiB v7x, ~102 MiB v5e/v6e
    mxu_rows = _mxu_row_target()

    in_b = jnp.dtype(theta.dtype).itemsize
    out_b = jnp.dtype(out_dtype).itemsize
    mm_b = jnp.dtype(mm_dtype).itemsize

    # Key-tiled online softmax once the monolithic (S, S) f32 working set
    # threatens VMEM (earlier on v7x's 64 MiB than on v5e/v6e's 128 MiB).
    use_flash = force_flash or S >= (1024 if vmem_cap <= 64 * 2**20 else 2048)

    if not use_flash:
        bb = batch_block if batch_block is not None else _pick_batch_block(
            B, S, mxu_rows)
        assert B % bb == 0
        grid = (B // bb,)

        flops = 2 * B * S * D * D + 4 * B * S * S * D
        transcendentals = B * S * (S + 1)
        bytes_accessed = (B * S * D * in_b + D * D * 4 + D * 4
                          + B * S * 2 * D * out_b)

        blk = 2 * (bb * S * D * in_b + bb * S * 2 * D * out_b
                   + D * D * 4 + D * 4)
        interm = 3 * bb * S * S * 4 + bb * S * D * (3 * 4 + 2 * mm_b)
        vmem_limit = min(vmem_budget, max(32 * 2**20, 2 * (blk + interm)))

        kernel = functools.partial(_attn_concat_kernel, mm_dtype=mm_dtype)
        return pl.pallas_call(
            kernel,
            out_shape=jax.ShapeDtypeStruct((B, S, 2 * D), out_dtype),
            grid_spec=pltpu.PrefetchScalarGridSpec(
                num_scalar_prefetch=0,
                grid=grid,
                in_specs=[
                    pl.BlockSpec((bb, S, D), lambda i: (i, 0, 0)),
                    pl.BlockSpec((D, D), lambda i: (0, 0)),
                    pl.BlockSpec((1, D), lambda i: (0, 0)),
                ],
                out_specs=pl.BlockSpec((bb, S, 2 * D), lambda i: (i, 0, 0)),
            ),
            compiler_params=pltpu.CompilerParams(
                dimension_semantics=("parallel",),
                vmem_limit_bytes=int(vmem_limit)),
            cost_estimate=pl.CostEstimate(
                flops=int(flops), transcendentals=int(transcendentals),
                bytes_accessed=int(bytes_accessed)),
        )(theta, w_s, b_s)

    # ---- key-tiled online-softmax path -------------------------------------
    bb = batch_block if batch_block is not None else 1
    assert B % bb == 0
    tq = q_tile if q_tile is not None else _pick_seq_tile(
        S, max(mxu_rows // bb, 8))
    tk = k_tile if k_tile is not None else _pick_seq_tile(S, 512)
    assert S % tq == 0 and S % tk == 0
    grid = (B // bb, S // tq, S // tk)
    nq = S // tq

    flops = 2 * B * S * D * D * (1 + nq) + 4 * B * S * S * D
    transcendentals = B * S * (S + 2)
    bytes_accessed = (B * S * D * in_b * (1 + nq) + D * D * 4 + D * 4
                      + B * S * 2 * D * out_b)

    blk = 2 * (bb * tq * D * in_b + bb * tk * D * in_b
               + bb * tq * 2 * D * out_b + D * D * 4 + D * 4)
    scratch = bb * tq * (D * mm_b + 2 * 4 + D * 4)
    interm = 2 * bb * tq * tk * 4 + bb * (tq + tk) * D * (4 + mm_b)
    vmem_limit = min(vmem_budget, max(32 * 2**20, 2 * (blk + scratch + interm)))

    kernel = functools.partial(_attn_concat_flash_kernel, mm_dtype=mm_dtype)
    return pl.pallas_call(
        kernel,
        out_shape=jax.ShapeDtypeStruct((B, S, 2 * D), out_dtype),
        grid_spec=pltpu.PrefetchScalarGridSpec(
            num_scalar_prefetch=0,
            grid=grid,
            in_specs=[
                pl.BlockSpec((bb, tq, D), lambda bi, qi, ki: (bi, qi, 0)),
                pl.BlockSpec((bb, tk, D), lambda bi, qi, ki: (bi, ki, 0)),
                pl.BlockSpec((D, D), lambda bi, qi, ki: (0, 0)),
                pl.BlockSpec((1, D), lambda bi, qi, ki: (0, 0)),
            ],
            out_specs=pl.BlockSpec((bb, tq, 2 * D),
                                   lambda bi, qi, ki: (bi, qi, 0)),
            scratch_shapes=[
                pltpu.VMEM((bb, tq, D), mm_dtype),      # projected Q tile
                pltpu.VMEM((bb, tq, 1), jnp.float32),   # running max
                pltpu.VMEM((bb, tq, 1), jnp.float32),   # running denominator
                pltpu.VMEM((bb, tq, D), jnp.float32),   # running AV accumulator
            ],
        ),
        compiler_params=pltpu.CompilerParams(
            dimension_semantics=("parallel", "parallel", "arbitrary"),
            vmem_limit_bytes=int(vmem_limit)),
        cost_estimate=pl.CostEstimate(
            flops=int(flops), transcendentals=int(transcendentals),
            bytes_accessed=int(bytes_accessed)),
    )(theta, theta, w_s, b_s)


def self_attention_reference(theta, w, b):
    """Pure-JAX f32 reference mirroring the PyTorch module exactly."""
    D = theta.shape[-1]
    query = jnp.einsum("bsd,ed->bse", theta, w) + b
    scores = jnp.einsum("bse,bte->bst", query, query) / (float(D) ** 0.5)
    attn = jax.nn.softmax(scores, axis=-1)
    attn_out = jnp.einsum("bst,btd->bsd", attn, theta)
    return jnp.concatenate([attn_out, theta], axis=-1)


if __name__ == "__main__":
    # Small shapes consistent with the module: batch=2, seq=8, feature_size=32.
    B, S, D = 2, 8, 32
    key = jax.random.PRNGKey(0)
    k_theta, k_w, k_b, k_theta2 = jax.random.split(key, 4)

    theta = jax.random.normal(k_theta, (B, S, D), dtype=jnp.float32)

    # Deterministic init matching torch.nn.Linear default: U(-1/sqrt(D), 1/sqrt(D)).
    bound = 1.0 / (D ** 0.5)
    w = jax.random.uniform(k_w, (D, D), minval=-bound, maxval=bound,
                           dtype=jnp.float32)
    b = jax.random.uniform(k_b, (D,), minval=-bound, maxval=bound,
                           dtype=jnp.float32)

    ref = self_attention_reference(theta, w, b)

    # Optimized path: bf16 MXU operands, f32 accumulation/softmax. Approx EUP
    # reciprocal + bf16 scores widen tolerance vs the f32 torch reference.
    out = jax.block_until_ready(
        self_attention_forward(theta, w, b, use_bf16_matmul=True))
    assert out.shape == (B, S, 2 * D), out.shape
    assert jnp.allclose(out, ref, atol=5e-2, rtol=5e-2), "bf16 path mismatch"

    # Full-precision path (approx EUP reciprocal is the only deviation).
    out_f32 = jax.block_until_ready(
        self_attention_forward(theta, w, b, use_bf16_matmul=False))
    assert jnp.allclose(out_f32, ref, atol=5e-3, rtol=5e-3), "f32 path mismatch"

    # Exercise the key-tiled online-softmax path (the large-S / v7x path) at a
    # small forced shape to validate the m/l/acc accumulator logic.
    B2, S2 = 2, 16
    theta2 = jax.random.normal(k_theta2, (B2, S2, D), dtype=jnp.float32)
    ref2 = self_attention_reference(theta2, w, b)
    out2 = jax.block_until_ready(
        self_attention_forward(theta2, w, b, use_bf16_matmul=False,
                               force_flash=True, q_tile=8, k_tile=8))
    assert out2.shape == (B2, S2, 2 * D), out2.shape
    assert jnp.allclose(out2, ref2, atol=5e-3, rtol=5e-3), "flash path mismatch"

    print("KERNEL_OK")
</pallas_src>

<mosaic_0001>
module attributes {stable_mosaic.version = 11 : i64} {
  func.func @_attn_concat_kernel(%arg0: i32, %arg1: memref<2x8x32xf32, #tpu.memory_space<vmem>>, %arg2: memref<32x32xf32, #tpu.memory_space<vmem>>, %arg3: memref<1x32xf32, #tpu.memory_space<vmem>>, %arg4: memref<2x8x64xf32, #tpu.memory_space<vmem>>) attributes {dimension_semantics = [#tpu.dimension_semantics<parallel>], iteration_bounds = array<i64: 1>, scalar_prefetch = 0 : i64, scratch_operands = 0 : i64, tpu.core_type = #tpu.core_type<tc>, window_params = [{transform_indices = @transform_0, window_bounds = array<i64: 2, 8, 32>}, {pipeline_mode = #tpu.pipeline_mode<synchronous>, transform_indices = @transform_1, window_bounds = array<i64: 32, 32>}, {pipeline_mode = #tpu.pipeline_mode<synchronous>, transform_indices = @transform_2, window_bounds = array<i64: 1, 32>}, {transform_indices = @transform_3, window_bounds = array<i64: 2, 8, 64>}]} {
    %c0 = arith.constant 0 : index
    %c0_0 = arith.constant 0 : index
    %c0_1 = arith.constant 0 : index
    %0 = vector.load %arg1[%c0, %c0_0, %c0_1] : memref<2x8x32xf32, #tpu.memory_space<vmem>>, vector<2x8x32xf32>
    %1 = arith.truncf %0 : vector<2x8x32xf32> to vector<2x8x32xbf16>
    %c0_2 = arith.constant 0 : index
    %c0_3 = arith.constant 0 : index
    %2 = vector.load %arg2[%c0_2, %c0_3] : memref<32x32xf32, #tpu.memory_space<vmem>>, vector<32x32xf32>
    %3 = arith.truncf %2 : vector<32x32xf32> to vector<32x32xbf16>
    %c0_4 = arith.constant 0 : index
    %c0_5 = arith.constant 0 : index
    %4 = vector.load %arg3[%c0_4, %c0_5] : memref<1x32xf32, #tpu.memory_space<vmem>>, vector<1x32xf32>
    %5 = vector.shape_cast %1 : vector<2x8x32xbf16> to vector<16x32xbf16>
    %cst = arith.constant dense<0.000000e+00> : vector<16x32xf32>
    %6 = tpu.matmul %5, %3, %cst {dimension_numbers = #tpu.dot_dimension_numbers<[1], [1], [0], [0], [0, 0, 1, 0], [], []>} : vector<16x32xbf16>, vector<32x32xbf16>, vector<16x32xf32> -> vector<16x32xf32>
    %7 = vector.broadcast %4 : vector<1x32xf32> to vector<16x32xf32>
    %8 = arith.addf %6, %7 : vector<16x32xf32>
    %9 = vector.shape_cast %8 : vector<16x32xf32> to vector<2x8x32xf32>
    %10 = arith.truncf %9 : vector<2x8x32xf32> to vector<2x8x32xbf16>
    "tpu.trace_start"() <{level = 10 : i32, message = "bse,bte->bst"}> : () -> ()
    %cst_6 = arith.constant dense<0.000000e+00> : vector<2x8x8xf32>
    %11 = tpu.matmul %10, %10, %cst_6 {dimension_numbers = #tpu.dot_dimension_numbers<[2], [2], [1], [1], [0, 0, 0, 1, 1, 1], [0], [0]>} : vector<2x8x32xbf16>, vector<2x8x32xbf16>, vector<2x8x8xf32> -> vector<2x8x8xf32>
    "tpu.trace_stop"() : () -> ()
    %cst_7 = arith.constant dense<0xFF800000> : vector<2x8xf32>
    %12 = vector.multi_reduction <maximumf>, %11, %cst_7 [2] : vector<2x8x8xf32> to vector<2x8xf32>
    %13 = vector.shape_cast %12 : vector<2x8xf32> to vector<2x8x1xf32>
    %14 = vector.broadcast %13 : vector<2x8x1xf32> to vector<2x8x8xf32>
    %15 = arith.subf %11, %14 : vector<2x8x8xf32>
    %16 = math.exp %15 : vector<2x8x8xf32>
    %cst_8 = arith.constant dense<0.000000e+00> : vector<2x8xf32>
    %17 = vector.multi_reduction <add>, %16, %cst_8 [2] : vector<2x8x8xf32> to vector<2x8xf32>
    %18 = vector.shape_cast %17 : vector<2x8xf32> to vector<2x8x1xf32>
    %19 = arith.truncf %16 : vector<2x8x8xf32> to vector<2x8x8xbf16>
    "tpu.trace_start"() <{level = 10 : i32, message = "bst,btd->bsd"}> : () -> ()
    %cst_9 = arith.constant dense<0.000000e+00> : vector<2x8x32xf32>
    %20 = tpu.matmul %19, %1, %cst_9 {dimension_numbers = #tpu.dot_dimension_numbers<[2], [1], [1], [2], [0, 0, 0, 1, 1, 2], [0], [0]>} : vector<2x8x8xbf16>, vector<2x8x32xbf16>, vector<2x8x32xf32> -> vector<2x8x32xf32>
    "tpu.trace_stop"() : () -> ()
    %21 = tpu.reciprocal %18 {approx = true} : vector<2x8x1xf32> -> vector<2x8x1xf32>
    %22 = vector.broadcast %21 : vector<2x8x1xf32> to vector<2x8x32xf32>
    %23 = arith.mulf %20, %22 : vector<2x8x32xf32>
    %24 = tpu.concatenate %23, %0 in 2 : vector<2x8x32xf32>, vector<2x8x32xf32> -> vector<2x8x64xf32>
    %c0_10 = arith.constant 0 : index
    %c0_11 = arith.constant 0 : index
    %c0_12 = arith.constant 0 : index
    %25 = vector.load %arg4[%c0_10, %c0_11, %c0_12] : memref<2x8x64xf32, #tpu.memory_space<vmem>>, vector<2x8x64xf32>
    tpu.vector_store %arg4[%c0_10, %c0_11, %c0_12], %24 {strides = array<i32>} : memref<2x8x64xf32, #tpu.memory_space<vmem>>, vector<2x8x64xf32>,
    return
  }
  func.func @transform_0(%arg0: i32) -> (i32, i32, i32) {
    %c0_i32 = arith.constant 0 : i32
    %c0_i32_0 = arith.constant 0 : i32
    %c0_i32_1 = arith.constant 0 : i32
    return %arg0, %c0_i32, %c0_i32_0 : i32, i32, i32
  }
  func.func @transform_1(%arg0: i32) -> (i32, i32) {
    %c0_i32 = arith.constant 0 : i32
    %c0_i32_0 = arith.constant 0 : i32
    %c0_i32_1 = arith.constant 0 : i32
    return %c0_i32, %c0_i32_0 : i32, i32
  }
  func.func @transform_2(%arg0: i32) -> (i32, i32) {
    %c0_i32 = arith.constant 0 : i32
    %c0_i32_0 = arith.constant 0 : i32
    %c0_i32_1 = arith.constant 0 : i32
    return %c0_i32, %c0_i32_0 : i32, i32
  }
  func.func @transform_3(%arg0: i32) -> (i32, i32, i32) {
    %c0_i32 = arith.constant 0 : i32
    %c0_i32_0 = arith.constant 0 : i32
    %c0_i32_1 = arith.constant 0 : i32
    return %arg0, %c0_i32, %c0_i32_0 : i32, i32, i32
  }
}

</mosaic_0001>

<llo_original>
// kernel: tpu_custom_call.1
$region0: #{tpu_custom_call.1}
  #allocation0 [shape = 'u32[]', space=smem, size = 0x4, offset = 0x4, fixed_abs, tag = 'smem constant byte address 0x4 - core index']
  #allocation1 [shape = 'u32[144,128]{1,0:T(1,128)}', space=vmem, size = 0x12000, scoped, tag = 'internal scratch']
  %s0 = inlined_call_operand.hbm [shape: f32[2,8,32], index: 0, kind: input, shape index: {}]
  %s1 = inlined_call_operand.hbm [shape: f32[32,32], index: 1, kind: input, shape index: {}]
  %s2 = inlined_call_operand.vmem [shape: f32[1,32], index: 2, kind: input, shape index: {}]
  %s3 = inlined_call_operand.hbm [shape: f32[2,8,64], index: 3, kind: output, shape index: {}]
  %s4 = sld [smem:[#allocation0]]
  $region30: #{tpu_custom_call.1} parent=0
    _
  %s6 = ssub.s32 1, %s4
  %s7 = scalar_select 0, %s6, %s4
  $region1: #{tpu_custom_call.1} parent=0
    #allocation2 [shape = 'u8[8192]{0}', space=vmem, size = 0x2000, scoped, tag = 'input window, operand 0, single buffered']
    #allocation3 [shape = 's32[1]{0}', space=sflag, size = 0x4, scoped, tag = 'scoped memory for tpu_custom_call.1']
    #allocation4 [shape = 's32[1]{0}', space=sflag, size = 0x4, scoped, tag = 'scoped memory for tpu_custom_call.1']
    #allocation5 [shape = 'u8[16384]{0}', space=vmem, size = 0x4000, scoped, tag = 'input window, operand 1, single buffered']
    #allocation6 [shape = 's32[1]{0}', space=sflag, size = 0x4, scoped, tag = 'scoped memory for tpu_custom_call.1']
    #allocation7 [shape = 'u8[8192]{0}', space=vmem, size = 0x2000, scoped, tag = 'output window, operand 0, single buffered']
    %8 = vsyncpa [#allocation3], 0
    %9 = vsyncpa [#allocation6], 0
    %10 = vsyncpa [#allocation4], 0
    // Predicated region
    $region2: #{tpu_custom_call.1} parent=1 // pred_check
      _
    $region3: #{tpu_custom_call.1} parent=1 // pred_check_branch
      %12 = sbr.rel (0) target = $region5
    $region4: #{tpu_custom_call.1} parent=1 // pred_region
      %s14 = ssub.s32 256, 256
      %15 = vsyncadd [#allocation3], %s14
      %s16 = sshll.u32 [#allocation2], 4
      %s17 = int_to_ptr.vmem [resolvable:$true] %s16
      %22 = dma.hbm_to_vmem [thread:$0]  %s0, 256, %s17, [#allocation3], 128, 128, 8
    $region5: #{tpu_custom_call.1} parent=1 // pred_fallthru
      _
    // Predicated region
    $region6: #{tpu_custom_call.1} parent=1 // pred_check
      _
    $region7: #{tpu_custom_call.1} parent=1 // pred_check_branch
      %24 = sbr.rel (0) target = $region9
    $region8: #{tpu_custom_call.1} parent=1 // pred_region
      %s26 = ssub.s32 512, 512
      %27 = vsyncadd [#allocation6], %s26
      %s28 = sshll.u32 [#allocation5], 4
      %s29 = int_to_ptr.vmem [resolvable:$true] %s28
      %34 = dma.hbm_to_vmem [thread:$0]  %s1, 512, %s29, [#allocation6], 128, 128, 8
    $region9: #{tpu_custom_call.1} parent=1 // pred_fallthru
      _
    // Predicated region
    $region10: #{tpu_custom_call.1} parent=1 // pred_check
      _
    $region11: #{tpu_custom_call.1} parent=1 // pred_check_branch
      %36 = sbr.rel (0) target = $region13
    $region12: #{tpu_custom_call.1} parent=1 // pred_region
      _
    $region13: #{tpu_custom_call.1} parent=1 // pred_fallthru
      _
    // Predicated region
    $region14: #{tpu_custom_call.1} parent=1 // pred_check
      _
    $region15: #{tpu_custom_call.1} parent=1 // pred_check_branch
      %38 = sbr.rel (0) target = $region17
    $region16: #{tpu_custom_call.1} parent=1 // pred_region
      %39 = dma.done [#allocation3], 256
    $region17: #{tpu_custom_call.1} parent=1 // pred_fallthru
      _
    // Predicated region
    $region18: #{tpu_custom_call.1} parent=1 // pred_check
      _
    $region19: #{tpu_custom_call.1} parent=1 // pred_check_branch
      %41 = sbr.rel (0) target = $region21
    $region20: #{tpu_custom_call.1} parent=1 // pred_region
      %42 = dma.done [#allocation6], 512
    $region21: #{tpu_custom_call.1} parent=1 // pred_fallthru
      _
    %v44 = vld [vmem:[#allocation2] sm:$0xff]
    %v45 = vld [vmem:[#allocation2 + $0x8] sm:$0xff]
    %v46 = vpack.c.bf16 %v44, %v44
    %v47 = vpack.c.bf16 %v45, %v45
    %v48 = vld [vmem:[#allocation5] sm:$0xff]
    %v49 = vld [vmem:[#allocation5 + $0x8] sm:$0xff]
    %v50 = vld [vmem:[#allocation5 + $0x10] sm:$0xff]
    %v51 = vld [vmem:[#allocation5 + $0x18] sm:$0xff]
    %v52 = vpack.c.bf16 %v49, %v48
    %v53 = vpack.c.bf16 %v51, %v50
    %v54 = vld [vmem:[%s2] sm:$0x1]
    %v56 = vlaneseq
    %v57 = vshrl.u32 %v56, 7
    %v58 = vsub.s32 0, %v57
    %v59 = vrot.slane %v54, %v58
    %v63 = vunpack.c.l.b16 %v46
    %v64 = vunpack.c.l.b16 %v47
    %v65 = vpack.c.b16 %v64, %v63
    %vm66 = vcmask 261120
    %v68 = vsel %vm66, %v65, 0
    %v71 = vsel %vm66, %v52, 0
    %v74 = vsel %vm66, %v53, 0
    %76 = vmatprep.subr.bf16.mxu0 0
    %77 = vmatpush1.bf16.xpose.msra.mxu0 0
    %78 = vmatprep.subr.bf16.mxu0 0
    %79 = vmatpush1.bf16.xpose.msra.mxu0 0
    %80 = vmatprep.subr.bf16.mxu0 0
    %81 = vmatpush1.bf16.xpose.msra.mxu0 0
    %82 = vmatprep.subr.bf16.mxu0 0
    %83 = vmatpush1.bf16.xpose.msra.mxu0 0
    %84 = vmatprep.subr.bf16.mxu0 0
    %85 = vmatpush1.bf16.xpose.msra.mxu0 0
    %86 = vmatprep.subr.bf16.mxu0 0
    %87 = vmatpush1.bf16.xpose.msra.mxu0 0
    %88 = vmatprep.subr.bf16.mxu0 0
    %89 = vmatpush1.bf16.xpose.msra.mxu0 %v74
    %90 = vmatprep.subr.bf16.mxu0 0
    %91 = vmatpush1.bf16.xpose.msra.mxu0 %v71
    %92 = vmatprep.subr.bf16.mxu0 0
    %93 = vmatpush2.bf16.xpose.msra.mxu0 0
    %94 = vmatprep.subr.bf16.mxu0 0
    %95 = vmatpush2.bf16.xpose.msra.mxu0 0
    %96 = vmatprep.subr.bf16.mxu0 0
    %97 = vmatpush2.bf16.xpose.msra.mxu0 0
    %98 = vmatprep.subr.bf16.mxu0 0
    %99 = vmatpush2.bf16.xpose.msra.mxu0 0
    %100 = vmatprep.subr.bf16.mxu0 0
    %101 = vmatpush2.bf16.xpose.msra.mxu0 0
    %102 = vmatprep.subr.bf16.mxu0 0
    %103 = vmatpush2.bf16.xpose.msra.mxu0 0
    %104 = vmatprep.subr.bf16.mxu0 0
    %105 = vmatpush2.bf16.xpose.msra.mxu0 0
    %106 = vmatprep.subr.bf16.mxu0 0
    %107 = vmatpush2.bf16.xpose.msra.mxu0 0
    %108 = vmatprep.mubr.bf16.mxu0 0
    %109 = vmatmul.mubr.bf16.gmra.mxu0 %v68
    %v110 = vpop.f32.mrf.mxu0
    %v111 = vadd.f32 %v59, %v110
    %v112 = vpop.f32.mrf.mxu0
    %v113 = vpop.f32.mrf.mxu0
    %v114 = vadd.f32 %v59, %v113
    %v115 = vpop.f32.mrf.mxu0
    %116 = vdwg.mxu0
    %v117 = vpack.c.bf16 %v111, %v111
    %v118 = vpack.c.bf16 %v114, %v114
    %v120 = vsel %vm66, %v117, 0
    %122 = vmatprep.subr.bf16.mxu0 0
    %123 = vmatpush1.bf16.xpose.msra.mxu0 0
    %124 = vmatprep.subr.bf16.mxu0 0
    %125 = vmatpush1.bf16.xpose.msra.mxu0 0
    %126 = vmatprep.subr.bf16.mxu0 0
    %127 = vmatpush1.bf16.xpose.msra.mxu0 0
    %128 = vmatprep.subr.bf16.mxu0 0
    %129 = vmatpush1.bf16.xpose.msra.mxu0 0
    %130 = vmatprep.subr.bf16.mxu0 0
    %131 = vmatpush1.bf16.xpose.msra.mxu0 0
    %132 = vmatprep.subr.bf16.mxu0 0
    %133 = vmatpush1.bf16.xpose.msra.mxu0 0
    %134 = vmatprep.subr.bf16.mxu0 0
    %135 = vmatpush1.bf16.xpose.msra.mxu0 0
    %136 = vmatprep.subr.bf16.mxu0 0
    %137 = vmatpush1.bf16.xpose.msra.mxu0 %v120
    %138 = vmatprep.subr.bf16.mxu0 0
    %139 = vmatpush2.bf16.xpose.msra.mxu0 0
    %140 = vmatprep.subr.bf16.mxu0 0
    %141 = vmatpush2.bf16.xpose.msra.mxu0 0
    %142 = vmatprep.subr.bf16.mxu0 0
    %143 = vmatpush2.bf16.xpose.msra.mxu0 0
    %144 = vmatprep.subr.bf16.mxu0 0
    %145 = vmatpush2.bf16.xpose.msra.mxu0 0
    %146 = vmatprep.subr.bf16.mxu0 0
    %147 = vmatpush2.bf16.xpose.msra.mxu0 0
    %148 = vmatprep.subr.bf16.mxu0 0
    %149 = vmatpush2.bf16.xpose.msra.mxu0 0
    %150 = vmatprep.subr.bf16.mxu0 0
    %151 = vmatpush2.bf16.xpose.msra.mxu0 0
    %152 = vmatprep.subr.bf16.mxu0 0
    %153 = vmatpush2.bf16.xpose.msra.mxu0 0
    %154 = vmatprep.mubr.bf16.mxu0 0
    %155 = vmatmul.mubr.bf16.gmra.mxu0 %v120
    %v156 = vpop.f32.mrf.mxu0
    %v157 = vadd.f32 0.0, %v156
    %v158 = vpop.f32.mrf.mxu0
    %v159 = vpop.f32.mrf.mxu0
    %v160 = vpop.f32.mrf.mxu0
    %161 = vdwg.mxu0
    %v163 = vsel %vm66, %v118, 0
    %165 = vmatprep.subr.bf16.mxu0 0
    %166 = vmatpush1.bf16.xpose.msra.mxu0 0
    %167 = vmatprep.subr.bf16.mxu0 0
    %168 = vmatpush1.bf16.xpose.msra.mxu0 0
    %169 = vmatprep.subr.bf16.mxu0 0
    %170 = vmatpush1.bf16.xpose.msra.mxu0 0
    %171 = vmatprep.subr.bf16.mxu0 0
    %172 = vmatpush1.bf16.xpose.msra.mxu0 0
    %173 = vmatprep.subr.bf16.mxu0 0
    %174 = vmatpush1.bf16.xpose.msra.mxu0 0
    %175 = vmatprep.subr.bf16.mxu0 0
    %176 = vmatpush1.bf16.xpose.msra.mxu0 0
    %177 = vmatprep.subr.bf16.mxu0 0
    %178 = vmatpush1.bf16.xpose.msra.mxu0 0
    %179 = vmatprep.subr.bf16.mxu0 0
    %180 = vmatpush1.bf16.xpose.msra.mxu0 %v163
    %181 = vmatprep.subr.bf16.mxu0 0
    %182 = vmatpush2.bf16.xpose.msra.mxu0 0
    %183 = vmatprep.subr.bf16.mxu0 0
    %184 = vmatpush2.bf16.xpose.msra.mxu0 0
    %185 = vmatprep.subr.bf16.mxu0 0
    %186 = vmatpush2.bf16.xpose.msra.mxu0 0
    %187 = vmatprep.subr.bf16.mxu0 0
    %188 = vmatpush2.bf16.xpose.msra.mxu0 0
    %189 = vmatprep.subr.bf16.mxu0 0
    %190 = vmatpush2.bf16.xpose.msra.mxu0 0
    %191 = vmatprep.subr.bf16.mxu0 0
    %192 = vmatpush2.bf16.xpose.msra.mxu0 0
    %193 = vmatprep.subr.bf16.mxu0 0
    %194 = vmatpush2.bf16.xpose.msra.mxu0 0
    %195 = vmatprep.subr.bf16.mxu0 0
    %196 = vmatpush2.bf16.xpose.msra.mxu0 0
    %197 = vmatprep.mubr.bf16.mxu0 0
    %198 = vmatmul.mubr.bf16.gmra.mxu0 %v163
    %v199 = vpop.f32.mrf.mxu0
    %v200 = vadd.f32 0.0, %v199
    %v201 = vpop.f32.mrf.mxu0
    %v202 = vpop.f32.mrf.mxu0
    %v203 = vpop.f32.mrf.mxu0
    %204 = vdwg.mxu0
    %vm205 = vcmask 64512
    %v206 = vsel %vm205, %v157, -inf
    %207 = vmax.xlane.f32.xlu0 %v206
    %v208 = vpop.xlane.xlu0 %207
    %v209 = vsel %vm205, %v200, -inf
    %210 = vmax.xlane.f32.xlu0 %v209
    %v211 = vpop.xlane.xlu0 %210
    %v212 = vsub.f32 %v157, %v208
    %v213 = vsub.f32 %v200, %v211
    %v214 = vmul.f32 %v212, 1.442695
    %v215 = vpow.pop %v214
    %v216 = vmul.f32 %v213, 1.442695
    %v217 = vpow.pop %v216
    %v218 = vsel %vm205, %v215, 0.0
    %219 = vadd.xlane.f32.xlu0 %v218
    %v220 = vpop.xlane.xlu0 %219
    %v221 = vsel %vm205, %v217, 0.0
    %222 = vadd.xlane.f32.xlu0 %v221
    %v223 = vpop.xlane.xlu0 %222
    %v224 = vpack.c.bf16 %v215, %v215
    %v225 = vpack.c.bf16 %v217, %v217
    %v227 = vsel %vm205, %v224, 0
    %vm229 = vcmask 1043456
    %v231 = vsel %vm229, %v46, 0
    %233 = vmatprep.subr.bf16.mxu0 0
    %234 = vmatpush1.bf16.msra.mxu0 0
    %235 = vmatprep.subr.bf16.mxu0 0
    %236 = vmatpush1.bf16.msra.mxu0 0
    %237 = vmatprep.subr.bf16.mxu0 0
    %238 = vmatpush1.bf16.msra.mxu0 0
    %239 = vmatprep.subr.bf16.mxu0 0
    %240 = vmatpush1.bf16.msra.mxu0 0
    %241 = vmatprep.subr.bf16.mxu0 0
    %242 = vmatpush1.bf16.msra.mxu0 0
    %243 = vmatprep.subr.bf16.mxu0 0
    %244 = vmatpush1.bf16.msra.mxu0 0
    %245 = vmatprep.subr.bf16.mxu0 0
    %246 = vmatpush1.bf16.msra.mxu0 0
    %247 = vmatprep.subr.bf16.mxu0 0
    %248 = vmatpush1.bf16.msra.mxu0 %v231
    %249 = vmatprep.subr.bf16.mxu0 0
    %250 = vmatpush2.bf16.msra.mxu0 0
    %251 = vmatprep.subr.bf16.mxu0 0
    %252 = vmatpush2.bf16.msra.mxu0 0
    %253 = vmatprep.subr.bf16.mxu0 0
    %254 = vmatpush2.bf16.msra.mxu0 0
    %255 = vmatprep.subr.bf16.mxu0 0
    %256 = vmatpush2.bf16.msra.mxu0 0
    %257 = vmatprep.subr.bf16.mxu0 0
    %258 = vmatpush2.bf16.msra.mxu0 0
    %259 = vmatprep.subr.bf16.mxu0 0
    %260 = vmatpush2.bf16.msra.mxu0 0
    %261 = vmatprep.subr.bf16.mxu0 0
    %262 = vmatpush2.bf16.msra.mxu0 0
    %263 = vmatprep.subr.bf16.mxu0 0
    %264 = vmatpush2.bf16.msra.mxu0 0
    %265 = vmatprep.mubr.bf16.mxu0 0
    %266 = vmatmul.mubr.bf16.gmra.mxu0 %v227
    %v267 = vpop.f32.mrf.mxu0
    %v268 = vadd.f32 0.0, %v267
    %v269 = vpop.f32.mrf.mxu0
    %v270 = vpop.f32.mrf.mxu0
    %v271 = vpop.f32.mrf.mxu0
    %272 = vdwg.mxu0
    %v274 = vsel %vm205, %v225, 0
    %v277 = vsel %vm229, %v47, 0
    %279 = vmatprep.subr.bf16.mxu0 0
    %280 = vmatpush1.bf16.msra.mxu0 0
    %281 = vmatprep.subr.bf16.mxu0 0
    %282 = vmatpush1.bf16.msra.mxu0 0
    %283 = vmatprep.subr.bf16.mxu0 0
    %284 = vmatpush1.bf16.msra.mxu0 0
    %285 = vmatprep.subr.bf16.mxu0 0
    %286 = vmatpush1.bf16.msra.mxu0 0
    %287 = vmatprep.subr.bf16.mxu0 0
    %288 = vmatpush1.bf16.msra.mxu0 0
    %289 = vmatprep.subr.bf16.mxu0 0
    %290 = vmatpush1.bf16.msra.mxu0 0
    %291 = vmatprep.subr.bf16.mxu0 0
    %292 = vmatpush1.bf16.msra.mxu0 0
    %293 = vmatprep.subr.bf16.mxu0 0
    %294 = vmatpush1.bf16.msra.mxu0 %v277
    %295 = vmatprep.subr.bf16.mxu0 0
    %296 = vmatpush2.bf16.msra.mxu0 0
    %297 = vmatprep.subr.bf16.mxu0 0
    %298 = vmatpush2.bf16.msra.mxu0 0
    %299 = vmatprep.subr.bf16.mxu0 0
    %300 = vmatpush2.bf16.msra.mxu0 0
    %301 = vmatprep.subr.bf16.mxu0 0
    %302 = vmatpush2.bf16.msra.mxu0 0
    %303 = vmatprep.subr.bf16.mxu0 0
    %304 = vmatpush2.bf16.msra.mxu0 0
    %305 = vmatprep.subr.bf16.mxu0 0
    %306 = vmatpush2.bf16.msra.mxu0 0
    %307 = vmatprep.subr.bf16.mxu0 0
    %308 = vmatpush2.bf16.msra.mxu0 0
    %309 = vmatprep.subr.bf16.mxu0 0
    %310 = vmatpush2.bf16.msra.mxu0 0
    %311 = vmatprep.mubr.bf16.mxu0 0
    %312 = vmatmul.mubr.bf16.gmra.mxu0 %v274
    %v313 = vpop.f32.mrf.mxu0
    %v314 = vadd.f32 0.0, %v313
    %v315 = vpop.f32.mrf.mxu0
    %v316 = vpop.f32.mrf.mxu0
    %v317 = vpop.f32.mrf.mxu0
    %318 = vdwg.mxu0
    %v319 = vrcp.pop %v220
    %v320 = vrcp.pop %v223
    %v321 = vmul.f32 %v268, %v319
    %v322 = vmul.f32 %v314, %v320
    %325 = vrot.lane.b32.xlu0 %v44, 32
    %v326 = vpop.permute.xlu0 %325
    %327 = vrot.lane.b32.xlu0 %v45, 32
    %v328 = vpop.permute.xlu0 %327
    %v331 = vsel %vm66, %v321, %v326
    %v332 = vsel %vm66, %v322, %v328
    %vm333 = vcmask 523264
    %334 = vst.msk [vmem:[#allocation7] sm:$0xff] %vm333, %v331
    %335 = vst.msk [vmem:[#allocation7 + $0x8] sm:$0xff] %vm333, %v332
    // Predicated region
    $region22: #{tpu_custom_call.1} parent=1 // pred_check
      _
    $region23: #{tpu_custom_call.1} parent=1 // pred_check_branch
      %337 = sbr.rel (0) target = $region25
    $region24: #{tpu_custom_call.1} parent=1 // pred_region
      %s339 = ssub.s32 256, 256
      %340 = vsyncadd [#allocation4], %s339
      %s341 = sshll.u32 [#allocation7], 4
      %s342 = int_to_ptr.vmem [resolvable:$true] %s341
      %347 = dma.vmem_to_hbm [thread:$0]  %s342, 256, %s3, [#allocation4], 128, 128, 8
    $region25: #{tpu_custom_call.1} parent=1 // pred_fallthru
      _
    // Predicated region
    $region26: #{tpu_custom_call.1} parent=1 // pred_check
      _
    $region27: #{tpu_custom_call.1} parent=1 // pred_check_branch
      %349 = sbr.rel (0) target = $region29
    $region28: #{tpu_custom_call.1} parent=1 // pred_region
      %350 = dma.done [#allocation4], 256
    $region29: #{tpu_custom_call.1} parent=1 // pred_fallthru
      _
    %351 = vsyncpa [#allocation3], 1
    %352 = vsyncpa [#allocation6], 1
    %353 = vsyncpa [#allocation4], 1

</llo_original>
